<compile_context>
chip_gen: v6e
topology: v6e:2x2x1
jax: 0.10.0
libtpu: 0.0.40
codegen_flags: <defaults>
</compile_context>

<pallas_src>
import jax
import jax.numpy as jnp
from jax.experimental import pallas as pl
from jax.experimental.pallas import tpu as pltpu


_MAX_TILE_ROWS = 4096  # fits VMEM on v5e/v6e/v7x with big margin


def _round_up(n, m):
    return ((n + m - 1) // m) * m


def _choose_batch_tile(batch):
    """Sublane-aligned batch tile: >=2 grid steps when possible (v7x megacore),
    <= _MAX_TILE_ROWS rows per step, no wrapper-side batch padding needed."""
    if batch <= 8:
        return batch  # single tile; block dim == full array dim is allowed
    n_tiles = max(2, pl.cdiv(batch, _MAX_TILE_ROWS))
    tile = _round_up(pl.cdiv(batch, n_tiles), 8)
    return min(tile, _MAX_TILE_ROWS)


def _mlp_softmax_kernel(x_ref, w1_ref, b1_ref, w2_ref, b2_ref, w3_ref, b3_ref,
                        o_ref):
    """linear->ReLU, linear->ReLU, linear, softmax(dim=-1) for one batch tile."""
    x = x_ref[...]

    # linear  : (tb, 27) @ (27, 32) + b1, ReLU
    h1 = jnp.dot(x, w1_ref[...], preferred_element_type=jnp.float32)
    h1 = jnp.maximum(h1 + b1_ref[...], 0.0)

    # linear2 : (tb, 32) @ (32, 16) + b2, ReLU
    h2 = jnp.dot(h1, w2_ref[...], preferred_element_type=jnp.float32)
    h2 = jnp.maximum(h2 + b2_ref[...], 0.0)

    # linear3 : (tb, 16) @ (16, 18) + b3   (no ReLU)
    logits = jnp.dot(h2, w3_ref[...], preferred_element_type=jnp.float32)
    logits = logits + b3_ref[...]

    # numerically stable softmax over last axis; reciprocal goes to the EUP.
    m = jnp.max(logits, axis=-1, keepdims=True)
    e = jnp.exp(logits - m)
    inv = pl.reciprocal(jnp.sum(e, axis=-1, keepdims=True), approx=False)
    o_ref[...] = e * inv


@jax.jit
def torch_estimator_forward(x, w1, b1, w2, b2, w3, b3):
    batch, in_dim = x.shape
    h1 = w1.shape[1]
    h2 = w2.shape[1]
    out_dim = w3.shape[1]

    tile_b = _choose_batch_tile(batch)
    grid = (pl.cdiv(batch, tile_b),)

    flops = 2 * batch * (in_dim * h1 + h1 * h2 + h2 * out_dim)
    bytes_accessed = 4 * (batch * in_dim + batch * out_dim
                          + in_dim * h1 + h1 + h1 * h2 + h2
                          + h2 * out_dim + out_dim)

    out = pl.pallas_call(
        _mlp_softmax_kernel,
        out_shape=jax.ShapeDtypeStruct((batch, out_dim), jnp.float32),
        grid=grid,
        in_specs=[
            # x: one batch tile per grid step (double-buffered DMA pipeline);
            # last block dim == full in_dim (27) is allowed.
            pl.BlockSpec((tile_b, in_dim), lambda i: (i, 0)),
            # weights / biases: constant block index -> VMEM-resident, full dims.
            pl.BlockSpec((in_dim, h1), lambda i: (0, 0)),
            pl.BlockSpec((1, h1), lambda i: (0, 0)),
            pl.BlockSpec((h1, h2), lambda i: (0, 0)),
            pl.BlockSpec((1, h2), lambda i: (0, 0)),
            pl.BlockSpec((h2, out_dim), lambda i: (0, 0)),
            pl.BlockSpec((1, out_dim), lambda i: (0, 0)),
        ],
        out_specs=pl.BlockSpec((tile_b, out_dim), lambda i: (i, 0)),
        compiler_params=pltpu.CompilerParams(
            # batch tiles are independent -> shard across TCs on v7x megacore.
            dimension_semantics=("parallel",),
        ),
        cost_estimate=pl.CostEstimate(
            flops=flops,
            transcendentals=batch * out_dim,
            bytes_accessed=bytes_accessed,
        ),
    )(x, w1, b1, w2, b2, w3, b3)

    return out
    # NOTE: if a profile ever shows exposed DMA at step boundaries, deepen the
    # pipeline with pipeline_mode=pl.Buffered(3) on the x / out BlockSpecs.
    # TODO(synk): cast x/weights to bf16 at this boundary on v6e/v7x for the
    # memory-bound large-batch case (kept f32 to hold the 1e-5 tolerance).


def init_params(key, view_range, move_range, attack_range):
    """Deterministic synthetic parameters matching TorchEstimator.__init__ shapes."""
    v = (1 + view_range * 2) ** 2
    m = (1 + move_range * 2) ** 2
    a = (1 + attack_range * 2) ** 2
    in_dim, h1, h2, out_dim = 3 * v, 32, 16, m + a

    ks = jax.random.split(key, 6)

    def uniform_fan_in(k, shape, fan_in):
        bound = 1.0 / jnp.sqrt(jnp.asarray(fan_in, jnp.float32))
        return jax.random.uniform(k, shape, jnp.float32, -bound, bound)

    # Weights as (in, out) for x @ W; same math as PyTorch's Linear.
    w1 = uniform_fan_in(ks[0], (in_dim, h1), in_dim)
    b1 = uniform_fan_in(ks[1], (1, h1), in_dim)
    w2 = uniform_fan_in(ks[2], (h1, h2), h1)
    b2 = uniform_fan_in(ks[3], (1, h2), h1)
    w3 = uniform_fan_in(ks[4], (h2, out_dim), h2)
    b3 = uniform_fan_in(ks[5], (1, out_dim), h2)
    return (w1, b1, w2, b2, w3, b3), in_dim, out_dim


def reference_forward(x, w1, b1, w2, b2, w3, b3):
    h1 = jnp.maximum(x @ w1 + b1, 0.0)
    h2 = jnp.maximum(h1 @ w2 + b2, 0.0)
    logits = h2 @ w3 + b3
    return jax.nn.softmax(logits, axis=-1)


if __name__ == "__main__":
    key = jax.random.PRNGKey(0)
    k_param, k_x, k_x2 = jax.random.split(key, 3)

    # TorchEstimator(view_range=1, move_range=1, attack_range=1):
    #   input dims = 3 * (1+2)^2 = 27, output dims = 9 + 9 = 18
    view_range, move_range, attack_range = 1, 1, 1
    params, in_dim, out_dim = init_params(k_param, view_range, move_range,
                                          attack_range)

    # Small batch (per-agent inference shape). Single-tile grid.
    batch = 8
    x = jax.random.normal(k_x, (batch, in_dim), jnp.float32)
    out = jax.block_until_ready(torch_estimator_forward(x, *params))
    ref = reference_forward(x, *params)
    assert out.shape == (batch, out_dim)
    assert jnp.allclose(out, ref, atol=1e-5, rtol=1e-5)
    assert jnp.allclose(jnp.sum(out, axis=-1), 1.0, atol=1e-5)

    # Larger, ragged batch: 2 grid steps (304-row tiles, partial last block).
    batch2 = 600
    x2 = jax.random.normal(k_x2, (batch2, in_dim), jnp.float32)
    out2 = jax.block_until_ready(torch_estimator_forward(x2, *params))
    ref2 = reference_forward(x2, *params)
    assert out2.shape == (batch2, out_dim)
    assert jnp.allclose(out2, ref2, atol=1e-5, rtol=1e-5)
    assert jnp.allclose(jnp.sum(out2, axis=-1), 1.0, atol=1e-5)

    print("KERNEL_OK")
</pallas_src>

<mosaic_0001>
module attributes {stable_mosaic.version = 11 : i64} {
  func.func @_mlp_softmax_kernel(%arg0: i32, %arg1: memref<8x27xf32, #tpu.memory_space<vmem>>, %arg2: memref<27x32xf32, #tpu.memory_space<vmem>>, %arg3: memref<1x32xf32, #tpu.memory_space<vmem>>, %arg4: memref<32x16xf32, #tpu.memory_space<vmem>>, %arg5: memref<1x16xf32, #tpu.memory_space<vmem>>, %arg6: memref<16x18xf32, #tpu.memory_space<vmem>>, %arg7: memref<1x18xf32, #tpu.memory_space<vmem>>, %arg8: memref<8x18xf32, #tpu.memory_space<vmem>>) attributes {dimension_semantics = [#tpu.dimension_semantics<parallel>], iteration_bounds = array<i64: 1>, scalar_prefetch = 0 : i64, scratch_operands = 0 : i64, tpu.core_type = #tpu.core_type<tc>, window_params = [{transform_indices = @transform_0, window_bounds = array<i64: 8, 27>}, {pipeline_mode = #tpu.pipeline_mode<synchronous>, transform_indices = @transform_1, window_bounds = array<i64: 27, 32>}, {pipeline_mode = #tpu.pipeline_mode<synchronous>, transform_indices = @transform_2, window_bounds = array<i64: 1, 32>}, {pipeline_mode = #tpu.pipeline_mode<synchronous>, transform_indices = @transform_3, window_bounds = array<i64: 32, 16>}, {pipeline_mode = #tpu.pipeline_mode<synchronous>, transform_indices = @transform_4, window_bounds = array<i64: 1, 16>}, {pipeline_mode = #tpu.pipeline_mode<synchronous>, transform_indices = @transform_5, window_bounds = array<i64: 16, 18>}, {pipeline_mode = #tpu.pipeline_mode<synchronous>, transform_indices = @transform_6, window_bounds = array<i64: 1, 18>}, {transform_indices = @transform_7, window_bounds = array<i64: 8, 18>}]} {
    %c0 = arith.constant 0 : index
    %c0_0 = arith.constant 0 : index
    %0 = vector.load %arg1[%c0, %c0_0] : memref<8x27xf32, #tpu.memory_space<vmem>>, vector<8x27xf32>
    %c0_1 = arith.constant 0 : index
    %c0_2 = arith.constant 0 : index
    %1 = vector.load %arg2[%c0_1, %c0_2] : memref<27x32xf32, #tpu.memory_space<vmem>>, vector<27x32xf32>
    %cst = arith.constant dense<0.000000e+00> : vector<8x32xf32>
    %2 = tpu.matmul %0, %1, %cst {dimension_numbers = #tpu.dot_dimension_numbers<[1], [0], [0], [1], [0, 0, 1, 1], [], []>} : vector<8x27xf32>, vector<27x32xf32>, vector<8x32xf32> -> vector<8x32xf32>
    %c0_3 = arith.constant 0 : index
    %c0_4 = arith.constant 0 : index
    %3 = vector.load %arg3[%c0_3, %c0_4] : memref<1x32xf32, #tpu.memory_space<vmem>>, vector<1x32xf32>
    %4 = vector.broadcast %3 : vector<1x32xf32> to vector<8x32xf32>
    %5 = arith.addf %2, %4 : vector<8x32xf32>
    %cst_5 = arith.constant 0.000000e+00 : f32
    %6 = vector.broadcast %cst_5 : f32 to vector<8x32xf32>
    %7 = arith.maximumf %5, %6 : vector<8x32xf32>
    %c0_6 = arith.constant 0 : index
    %c0_7 = arith.constant 0 : index
    %8 = vector.load %arg4[%c0_6, %c0_7] : memref<32x16xf32, #tpu.memory_space<vmem>>, vector<32x16xf32>
    %cst_8 = arith.constant dense<0.000000e+00> : vector<8x16xf32>
    %9 = tpu.matmul %7, %8, %cst_8 {dimension_numbers = #tpu.dot_dimension_numbers<[1], [0], [0], [1], [0, 0, 1, 1], [], []>} : vector<8x32xf32>, vector<32x16xf32>, vector<8x16xf32> -> vector<8x16xf32>
    %c0_9 = arith.constant 0 : index
    %c0_10 = arith.constant 0 : index
    %10 = vector.load %arg5[%c0_9, %c0_10] : memref<1x16xf32, #tpu.memory_space<vmem>>, vector<1x16xf32>
    %11 = vector.broadcast %10 : vector<1x16xf32> to vector<8x16xf32>
    %12 = arith.addf %9, %11 : vector<8x16xf32>
    %cst_11 = arith.constant 0.000000e+00 : f32
    %13 = vector.broadcast %cst_11 : f32 to vector<8x16xf32>
    %14 = arith.maximumf %12, %13 : vector<8x16xf32>
    %c0_12 = arith.constant 0 : index
    %c0_13 = arith.constant 0 : index
    %15 = vector.load %arg6[%c0_12, %c0_13] : memref<16x18xf32, #tpu.memory_space<vmem>>, vector<16x18xf32>
    %cst_14 = arith.constant dense<0.000000e+00> : vector<8x18xf32>
    %16 = tpu.matmul %14, %15, %cst_14 {dimension_numbers = #tpu.dot_dimension_numbers<[1], [0], [0], [1], [0, 0, 1, 1], [], []>} : vector<8x16xf32>, vector<16x18xf32>, vector<8x18xf32> -> vector<8x18xf32>
    %c0_15 = arith.constant 0 : index
    %c0_16 = arith.constant 0 : index
    %17 = vector.load %arg7[%c0_15, %c0_16] : memref<1x18xf32, #tpu.memory_space<vmem>>, vector<1x18xf32>
    %18 = vector.broadcast %17 : vector<1x18xf32> to vector<8x18xf32>
    %19 = arith.addf %16, %18 : vector<8x18xf32>
    %cst_17 = arith.constant dense<0xFF800000> : vector<8xf32>
    %20 = vector.multi_reduction <maximumf>, %19, %cst_17 [1] : vector<8x18xf32> to vector<8xf32>
    %21 = vector.shape_cast %20 : vector<8xf32> to vector<8x1xf32>
    %22 = vector.broadcast %21 : vector<8x1xf32> to vector<8x18xf32>
    %23 = arith.subf %19, %22 : vector<8x18xf32>
    %24 = math.exp %23 : vector<8x18xf32>
    %cst_18 = arith.constant dense<0.000000e+00> : vector<8xf32>
    %25 = vector.multi_reduction <add>, %24, %cst_18 [1] : vector<8x18xf32> to vector<8xf32>
    %26 = vector.shape_cast %25 : vector<8xf32> to vector<8x1xf32>
    %27 = tpu.reciprocal %26 : vector<8x1xf32> -> vector<8x1xf32>
    %28 = vector.broadcast %27 : vector<8x1xf32> to vector<8x18xf32>
    %29 = arith.mulf %24, %28 : vector<8x18xf32>
    %c0_19 = arith.constant 0 : index
    %c0_20 = arith.constant 0 : index
    %30 = vector.load %arg8[%c0_19, %c0_20] : memref<8x18xf32, #tpu.memory_space<vmem>>, vector<8x18xf32>
    tpu.vector_store %arg8[%c0_19, %c0_20], %29 {strides = array<i32>} : memref<8x18xf32, #tpu.memory_space<vmem>>, vector<8x18xf32>,
    return
  }
  func.func @transform_0(%arg0: i32) -> (i32, i32) {
    %c0_i32 = arith.constant 0 : i32
    %c0_i32_0 = arith.constant 0 : i32
    return %arg0, %c0_i32 : i32, i32
  }
  func.func @transform_1(%arg0: i32) -> (i32, i32) {
    %c0_i32 = arith.constant 0 : i32
    %c0_i32_0 = arith.constant 0 : i32
    %c0_i32_1 = arith.constant 0 : i32
    return %c0_i32, %c0_i32_0 : i32, i32
  }
  func.func @transform_2(%arg0: i32) -> (i32, i32) {
    %c0_i32 = arith.constant 0 : i32
    %c0_i32_0 = arith.constant 0 : i32
    %c0_i32_1 = arith.constant 0 : i32
    return %c0_i32, %c0_i32_0 : i32, i32
  }
  func.func @transform_3(%arg0: i32) -> (i32, i32) {
    %c0_i32 = arith.constant 0 : i32
    %c0_i32_0 = arith.constant 0 : i32
    %c0_i32_1 = arith.constant 0 : i32
    return %c0_i32, %c0_i32_0 : i32, i32
  }
  func.func @transform_4(%arg0: i32) -> (i32, i32) {
    %c0_i32 = arith.constant 0 : i32
    %c0_i32_0 = arith.constant 0 : i32
    %c0_i32_1 = arith.constant 0 : i32
    return %c0_i32, %c0_i32_0 : i32, i32
  }
  func.func @transform_5(%arg0: i32) -> (i32, i32) {
    %c0_i32 = arith.constant 0 : i32
    %c0_i32_0 = arith.constant 0 : i32
    %c0_i32_1 = arith.constant 0 : i32
    return %c0_i32, %c0_i32_0 : i32, i32
  }
  func.func @transform_6(%arg0: i32) -> (i32, i32) {
    %c0_i32 = arith.constant 0 : i32
    %c0_i32_0 = arith.constant 0 : i32
    %c0_i32_1 = arith.constant 0 : i32
    return %c0_i32, %c0_i32_0 : i32, i32
  }
  func.func @transform_7(%arg0: i32) -> (i32, i32) {
    %c0_i32 = arith.constant 0 : i32
    %c0_i32_0 = arith.constant 0 : i32
    return %arg0, %c0_i32 : i32, i32
  }
}

</mosaic_0001>

<llo_original>
// kernel: torch_estimator_forward.1
$region0: #{torch_estimator_forward.1}
  #allocation0 [shape = 'u32[]', space=smem, size = 0x4, offset = 0x4, fixed_abs, tag = 'smem constant byte address 0x4 - core index']
  #allocation1 [shape = 'u32[144,128]{1,0:T(1,128)}', space=vmem, size = 0x12000, scoped, tag = 'internal scratch']
  %s0 = inlined_call_operand.hbm [shape: f32[8,27], index: 0, kind: input, shape index: {}]
  %s1 = inlined_call_operand.vmem [shape: f32[27,32], index: 1, kind: input, shape index: {}]
  %s2 = inlined_call_operand.vmem [shape: f32[1,32], index: 2, kind: input, shape index: {}]
  %s3 = inlined_call_operand.vmem [shape: f32[32,16], index: 3, kind: input, shape index: {}]
  %s4 = inlined_call_operand.vmem [shape: f32[1,16], index: 4, kind: input, shape index: {}]
  %s5 = inlined_call_operand.vmem [shape: f32[16,18], index: 5, kind: input, shape index: {}]
  %s6 = inlined_call_operand.vmem [shape: f32[1,18], index: 6, kind: input, shape index: {}]
  %s7 = inlined_call_operand.hbm [shape: f32[8,18], index: 7, kind: output, shape index: {}]
  %s8 = sld [smem:[#allocation0]]
  $region42: #{torch_estimator_forward.1} parent=0
    _
  %s10 = ssub.s32 1, %s8
  %s11 = scalar_select 0, %s10, %s8
  $region1: #{torch_estimator_forward.1} parent=0
    #allocation2 [shape = 'u8[4096]{0}', space=vmem, size = 0x1000, scoped, tag = 'input window, operand 0, single buffered']
    #allocation3 [shape = 's32[1]{0}', space=sflag, size = 0x4, scoped, tag = 'scoped memory for torch_estimator_forward.1']
    #allocation4 [shape = 's32[1]{0}', space=sflag, size = 0x4, scoped, tag = 'scoped memory for torch_estimator_forward.1']
    #allocation5 [shape = 'u8[4096]{0}', space=vmem, size = 0x1000, scoped, tag = 'output window, operand 0, single buffered']
    %12 = vsyncpa [#allocation3], 0
    %13 = vsyncpa [#allocation4], 0
    // Predicated region
    $region2: #{torch_estimator_forward.1} parent=1 // pred_check
      _
    $region3: #{torch_estimator_forward.1} parent=1 // pred_check_branch
      %15 = sbr.rel (0) target = $region5
    $region4: #{torch_estimator_forward.1} parent=1 // pred_region
      %s17 = ssub.s32 128, 128
      %18 = vsyncadd [#allocation3], %s17
      %s20 = sshll.u32 [#allocation2], 4
      %s21 = int_to_ptr.vmem [resolvable:$true] %s20
      %23 = dma.hbm_to_vmem [thread:$0]  %s0, 128, %s21, [#allocation3]
    $region5: #{torch_estimator_forward.1} parent=1 // pred_fallthru
      _
    // Predicated region
    $region6: #{torch_estimator_forward.1} parent=1 // pred_check
      _
    $region7: #{torch_estimator_forward.1} parent=1 // pred_check_branch
      %25 = sbr.rel (0) target = $region9
    $region8: #{torch_estimator_forward.1} parent=1 // pred_region
      _
    $region9: #{torch_estimator_forward.1} parent=1 // pred_fallthru
      _
    // Predicated region
    $region10: #{torch_estimator_forward.1} parent=1 // pred_check
      _
    $region11: #{torch_estimator_forward.1} parent=1 // pred_check_branch
      %27 = sbr.rel (0) target = $region13
    $region12: #{torch_estimator_forward.1} parent=1 // pred_region
      _
    $region13: #{torch_estimator_forward.1} parent=1 // pred_fallthru
      _
    // Predicated region
    $region14: #{torch_estimator_forward.1} parent=1 // pred_check
      _
    $region15: #{torch_estimator_forward.1} parent=1 // pred_check_branch
      %29 = sbr.rel (0) target = $region17
    $region16: #{torch_estimator_forward.1} parent=1 // pred_region
      _
    $region17: #{torch_estimator_forward.1} parent=1 // pred_fallthru
      _
    // Predicated region
    $region18: #{torch_estimator_forward.1} parent=1 // pred_check
      _
    $region19: #{torch_estimator_forward.1} parent=1 // pred_check_branch
      %31 = sbr.rel (0) target = $region21
    $region20: #{torch_estimator_forward.1} parent=1 // pred_region
      _
    $region21: #{torch_estimator_forward.1} parent=1 // pred_fallthru
      _
    // Predicated region
    $region22: #{torch_estimator_forward.1} parent=1 // pred_check
      _
    $region23: #{torch_estimator_forward.1} parent=1 // pred_check_branch
      %33 = sbr.rel (0) target = $region25
    $region24: #{torch_estimator_forward.1} parent=1 // pred_region
      _
    $region25: #{torch_estimator_forward.1} parent=1 // pred_fallthru
      _
    // Predicated region
    $region26: #{torch_estimator_forward.1} parent=1 // pred_check
      _
    $region27: #{torch_estimator_forward.1} parent=1 // pred_check_branch
      %35 = sbr.rel (0) target = $region29
    $region28: #{torch_estimator_forward.1} parent=1 // pred_region
      _
    $region29: #{torch_estimator_forward.1} parent=1 // pred_fallthru
      _
    // Predicated region
    $region30: #{torch_estimator_forward.1} parent=1 // pred_check
      _
    $region31: #{torch_estimator_forward.1} parent=1 // pred_check_branch
      %37 = sbr.rel (0) target = $region33
    $region32: #{torch_estimator_forward.1} parent=1 // pred_region
      %38 = dma.done [#allocation3], 128
    $region33: #{torch_estimator_forward.1} parent=1 // pred_fallthru
      _
    %v39 = vld [vmem:[#allocation2] sm:$0xff]
    %v40 = vld [vmem:[%s1] sm:$0xff]
    %v41 = vld [vmem:[%s1 + $0x8] sm:$0xff]
    %v42 = vld [vmem:[%s1 + $0x10] sm:$0xff]
    %v43 = vld [vmem:[%s1 + $0x18] sm:$0x7]
    %v44 = vld [vmem:[%s2] sm:$0x1]
    %v46 = vlaneseq
    %v47 = vshrl.u32 %v46, 7
    %v48 = vsub.s32 0, %v47
    %v49 = vrot.slane %v44, %v48
    %vm51 = vcmask 220160
    %v53 = vsel %vm51, %v39, 0
    %vm55 = vcmask 1042432
    %v57 = vsel %vm55, %v43, 0
    %59 = vmatprep.subr.mxu0 0.0
    %60 = vmatpush1.msra.mxu0 0.0
    %61 = vmatprep.subr.mxu0 0.0
    %62 = vmatpush1.msra.mxu0 0.0
    %63 = vmatprep.subr.mxu0 0.0
    %64 = vmatpush1.msra.mxu0 0.0
    %65 = vmatprep.subr.mxu0 0.0
    %66 = vmatpush1.msra.mxu0 0.0
    %67 = vmatprep.subr.mxu0 0.0
    %68 = vmatpush1.msra.mxu0 0.0
    %69 = vmatprep.subr.mxu0 0.0
    %70 = vmatpush1.msra.mxu0 0.0
    %71 = vmatprep.subr.mxu0 0.0
    %72 = vmatpush1.msra.mxu0 0.0
    %73 = vmatprep.subr.mxu0 0.0
    %74 = vmatpush1.msra.mxu0 0.0
    %75 = vmatprep.subr.mxu0 0.0
    %76 = vmatpush1.msra.mxu0 0.0
    %77 = vmatprep.subr.mxu0 0.0
    %78 = vmatpush1.msra.mxu0 0.0
    %79 = vmatprep.subr.mxu0 0.0
    %80 = vmatpush1.msra.mxu0 0.0
    %81 = vmatprep.subr.mxu0 0.0
    %82 = vmatpush1.msra.mxu0 0.0
    %83 = vmatprep.subr.mxu0 0.0
    %84 = vmatpush1.msra.mxu0 %v57
    %85 = vmatprep.subr.mxu0 0.0
    %86 = vmatpush1.msra.mxu0 %v42
    %87 = vmatprep.subr.mxu0 0.0
    %88 = vmatpush1.msra.mxu0 %v41
    %89 = vmatprep.subr.mxu0 0.0
    %90 = vmatpush1.msra.mxu0 %v40
    %91 = vmatprep.subr.mxu0 0.0
    %92 = vmatpush2.msra.mxu0 0.0
    %93 = vmatprep.subr.mxu0 0.0
    %94 = vmatpush2.msra.mxu0 0.0
    %95 = vmatprep.subr.mxu0 0.0
    %96 = vmatpush2.msra.mxu0 0.0
    %97 = vmatprep.subr.mxu0 0.0
    %98 = vmatpush2.msra.mxu0 0.0
    %99 = vmatprep.subr.mxu0 0.0
    %100 = vmatpush2.msra.mxu0 0.0
    %101 = vmatprep.subr.mxu0 0.0
    %102 = vmatpush2.msra.mxu0 0.0
    %103 = vmatprep.subr.mxu0 0.0
    %104 = vmatpush2.msra.mxu0 0.0
    %105 = vmatprep.subr.mxu0 0.0
    %106 = vmatpush2.msra.mxu0 0.0
    %107 = vmatprep.subr.mxu0 0.0
    %108 = vmatpush2.msra.mxu0 0.0
    %109 = vmatprep.subr.mxu0 0.0
    %110 = vmatpush2.msra.mxu0 0.0
    %111 = vmatprep.subr.mxu0 0.0
    %112 = vmatpush2.msra.mxu0 0.0
    %113 = vmatprep.subr.mxu0 0.0
    %114 = vmatpush2.msra.mxu0 0.0
    %115 = vmatprep.subr.mxu0 0.0
    %116 = vmatpush2.msra.mxu0 0.0
    %117 = vmatprep.subr.mxu0 0.0
    %118 = vmatpush2.msra.mxu0 0.0
    %119 = vmatprep.subr.mxu0 0.0
    %120 = vmatpush2.msra.mxu0 0.0
    %121 = vmatprep.subr.mxu0 0.0
    %122 = vmatpush2.msra.mxu0 0.0
    %123 = vmatprep.mubr.f32.mxu0 0.0
    %124 = vmatmul.mubr.f32.gmra.mxu0 %v53
    %v125 = vpop.f32.mrf.mxu0
    %v126 = vadd.f32 %v49, %v125
    %v127 = vpop.f32.mrf.mxu0
    %128 = vdwg.mxu0
    %v129 = vmax.f32 %v126, 0.0
    %v130 = vld [vmem:[%s3] sm:$0xff]
    %v131 = vld [vmem:[%s3 + $0x8] sm:$0xff]
    %v132 = vld [vmem:[%s3 + $0x10] sm:$0xff]
    %v133 = vld [vmem:[%s3 + $0x18] sm:$0xff]
    %v134 = vld [vmem:[%s4] sm:$0x1]
    %v136 = vlaneseq
    %v137 = vshrl.u32 %v136, 7
    %v138 = vsub.s32 0, %v137
    %v139 = vrot.slane %v134, %v138
    %vm141 = vcmask 261120
    %v143 = vsel %vm141, %v129, 0
    %145 = vmatprep.subr.mxu0 0.0
    %146 = vmatpush1.msra.mxu0 0.0
    %147 = vmatprep.subr.mxu0 0.0
    %148 = vmatpush1.msra.mxu0 0.0
    %149 = vmatprep.subr.mxu0 0.0
    %150 = vmatpush1.msra.mxu0 0.0
    %151 = vmatprep.subr.mxu0 0.0
    %152 = vmatpush1.msra.mxu0 0.0
    %153 = vmatprep.subr.mxu0 0.0
    %154 = vmatpush1.msra.mxu0 0.0
    %155 = vmatprep.subr.mxu0 0.0
    %156 = vmatpush1.msra.mxu0 0.0
    %157 = vmatprep.subr.mxu0 0.0
    %158 = vmatpush1.msra.mxu0 0.0
    %159 = vmatprep.subr.mxu0 0.0
    %160 = vmatpush1.msra.mxu0 0.0
    %161 = vmatprep.subr.mxu0 0.0
    %162 = vmatpush1.msra.mxu0 0.0
    %163 = vmatprep.subr.mxu0 0.0
    %164 = vmatpush1.msra.mxu0 0.0
    %165 = vmatprep.subr.mxu0 0.0
    %166 = vmatpush1.msra.mxu0 0.0
    %167 = vmatprep.subr.mxu0 0.0
    %168 = vmatpush1.msra.mxu0 0.0
    %169 = vmatprep.subr.mxu0 0.0
    %170 = vmatpush1.msra.mxu0 %v133
    %171 = vmatprep.subr.mxu0 0.0
    %172 = vmatpush1.msra.mxu0 %v132
    %173 = vmatprep.subr.mxu0 0.0
    %174 = vmatpush1.msra.mxu0 %v131
    %175 = vmatprep.subr.mxu0 0.0
    %176 = vmatpush1.msra.mxu0 %v130
    %177 = vmatprep.subr.mxu0 0.0
    %178 = vmatpush2.msra.mxu0 0.0
    %179 = vmatprep.subr.mxu0 0.0
    %180 = vmatpush2.msra.mxu0 0.0
    %181 = vmatprep.subr.mxu0 0.0
    %182 = vmatpush2.msra.mxu0 0.0
    %183 = vmatprep.subr.mxu0 0.0
    %184 = vmatpush2.msra.mxu0 0.0
    %185 = vmatprep.subr.mxu0 0.0
    %186 = vmatpush2.msra.mxu0 0.0
    %187 = vmatprep.subr.mxu0 0.0
    %188 = vmatpush2.msra.mxu0 0.0
    %189 = vmatprep.subr.mxu0 0.0
    %190 = vmatpush2.msra.mxu0 0.0
    %191 = vmatprep.subr.mxu0 0.0
    %192 = vmatpush2.msra.mxu0 0.0
    %193 = vmatprep.subr.mxu0 0.0
    %194 = vmatpush2.msra.mxu0 0.0
    %195 = vmatprep.subr.mxu0 0.0
    %196 = vmatpush2.msra.mxu0 0.0
    %197 = vmatprep.subr.mxu0 0.0
    %198 = vmatpush2.msra.mxu0 0.0
    %199 = vmatprep.subr.mxu0 0.0
    %200 = vmatpush2.msra.mxu0 0.0
    %201 = vmatprep.subr.mxu0 0.0
    %202 = vmatpush2.msra.mxu0 0.0
    %203 = vmatprep.subr.mxu0 0.0
    %204 = vmatpush2.msra.mxu0 0.0
    %205 = vmatprep.subr.mxu0 0.0
    %206 = vmatpush2.msra.mxu0 0.0
    %207 = vmatprep.subr.mxu0 0.0
    %208 = vmatpush2.msra.mxu0 0.0
    %209 = vmatprep.mubr.f32.mxu0 0.0
    %210 = vmatmul.mubr.f32.gmra.mxu0 %v143
    %v211 = vpop.f32.mrf.mxu0
    %v212 = vadd.f32 %v139, %v211
    %v213 = vpop.f32.mrf.mxu0
    %214 = vdwg.mxu0
    %v215 = vmax.f32 %v212, 0.0
    %v216 = vld [vmem:[%s5] sm:$0xff]
    %v217 = vld [vmem:[%s5 + $0x8] sm:$0xff]
    %v218 = vld [vmem:[%s6] sm:$0x1]
    %v220 = vlaneseq
    %v221 = vshrl.u32 %v220, 7
    %v222 = vsub.s32 0, %v221
    %v223 = vrot.slane %v218, %v222
    %vm225 = vcmask 130048
    %v227 = vsel %vm225, %v215, 0
    %229 = vmatprep.subr.mxu0 0.0
    %230 = vmatpush1.msra.mxu0 0.0
    %231 = vmatprep.subr.mxu0 0.0
    %232 = vmatpush1.msra.mxu0 0.0
    %233 = vmatprep.subr.mxu0 0.0
    %234 = vmatpush1.msra.mxu0 0.0
    %235 = vmatprep.subr.mxu0 0.0
    %236 = vmatpush1.msra.mxu0 0.0
    %237 = vmatprep.subr.mxu0 0.0
    %238 = vmatpush1.msra.mxu0 0.0
    %239 = vmatprep.subr.mxu0 0.0
    %240 = vmatpush1.msra.mxu0 0.0
    %241 = vmatprep.subr.mxu0 0.0
    %242 = vmatpush1.msra.mxu0 0.0
    %243 = vmatprep.subr.mxu0 0.0
    %244 = vmatpush1.msra.mxu0 0.0
    %245 = vmatprep.subr.mxu0 0.0
    %246 = vmatpush1.msra.mxu0 0.0
    %247 = vmatprep.subr.mxu0 0.0
    %248 = vmatpush1.msra.mxu0 0.0
    %249 = vmatprep.subr.mxu0 0.0
    %250 = vmatpush1.msra.mxu0 0.0
    %251 = vmatprep.subr.mxu0 0.0
    %252 = vmatpush1.msra.mxu0 0.0
    %253 = vmatprep.subr.mxu0 0.0
    %254 = vmatpush1.msra.mxu0 0.0
    %255 = vmatprep.subr.mxu0 0.0
    %256 = vmatpush1.msra.mxu0 0.0
    %257 = vmatprep.subr.mxu0 0.0
    %258 = vmatpush1.msra.mxu0 %v217
    %259 = vmatprep.subr.mxu0 0.0
    %260 = vmatpush1.msra.mxu0 %v216
    %261 = vmatprep.subr.mxu0 0.0
    %262 = vmatpush2.msra.mxu0 0.0
    %263 = vmatprep.subr.mxu0 0.0
    %264 = vmatpush2.msra.mxu0 0.0
    %265 = vmatprep.subr.mxu0 0.0
    %266 = vmatpush2.msra.mxu0 0.0
    %267 = vmatprep.subr.mxu0 0.0
    %268 = vmatpush2.msra.mxu0 0.0
    %269 = vmatprep.subr.mxu0 0.0
    %270 = vmatpush2.msra.mxu0 0.0
    %271 = vmatprep.subr.mxu0 0.0
    %272 = vmatpush2.msra.mxu0 0.0
    %273 = vmatprep.subr.mxu0 0.0
    %274 = vmatpush2.msra.mxu0 0.0
    %275 = vmatprep.subr.mxu0 0.0
    %276 = vmatpush2.msra.mxu0 0.0
    %277 = vmatprep.subr.mxu0 0.0
    %278 = vmatpush2.msra.mxu0 0.0
    %279 = vmatprep.subr.mxu0 0.0
    %280 = vmatpush2.msra.mxu0 0.0
    %281 = vmatprep.subr.mxu0 0.0
    %282 = vmatpush2.msra.mxu0 0.0
    %283 = vmatprep.subr.mxu0 0.0
    %284 = vmatpush2.msra.mxu0 0.0
    %285 = vmatprep.subr.mxu0 0.0
    %286 = vmatpush2.msra.mxu0 0.0
    %287 = vmatprep.subr.mxu0 0.0
    %288 = vmatpush2.msra.mxu0 0.0
    %289 = vmatprep.subr.mxu0 0.0
    %290 = vmatpush2.msra.mxu0 0.0
    %291 = vmatprep.subr.mxu0 0.0
    %292 = vmatpush2.msra.mxu0 0.0
    %293 = vmatprep.mubr.f32.mxu0 0.0
    %294 = vmatmul.mubr.f32.gmra.mxu0 %v227
    %v295 = vpop.f32.mrf.mxu0
    %v296 = vadd.f32 %v223, %v295
    %v297 = vpop.f32.mrf.mxu0
    %298 = vdwg.mxu0
    %vm299 = vcmask 146432
    %v300 = vsel %vm299, %v296, -inf
    %301 = vmax.xlane.f32.xlu0 %v300
    %v302 = vpop.xlane.xlu0 %301
    %v303 = vsub.f32 %v296, %v302
    %v304 = vmul.f32 %v303, 1.442695
    %v305 = vpow.pop %v304
    %v306 = vsel %vm299, %v305, 0.0
    %307 = vadd.xlane.f32.xlu0 %v306
    %v308 = vpop.xlane.xlu0 %307
    %v309 = vrcp.pop %v308
    %v310 = vmul.f32 %v305, %v309
    %311 = vst.msk [vmem:[#allocation5] sm:$0xff] %vm299, %v310
    // Predicated region
    $region34: #{torch_estimator_forward.1} parent=1 // pred_check
      _
    $region35: #{torch_estimator_forward.1} parent=1 // pred_check_branch
      %313 = sbr.rel (0) target = $region37
    $region36: #{torch_estimator_forward.1} parent=1 // pred_region
      %s315 = ssub.s32 128, 128
      %316 = vsyncadd [#allocation4], %s315
      %s318 = sshll.u32 [#allocation5], 4
      %s319 = int_to_ptr.vmem [resolvable:$true] %s318
      %321 = dma.vmem_to_hbm [thread:$0]  %s319, 128, %s7, [#allocation4]
    $region37: #{torch_estimator_forward.1} parent=1 // pred_fallthru
      _
    // Predicated region
    $region38: #{torch_estimator_forward.1} parent=1 // pred_check
      _
    $region39: #{torch_estimator_forward.1} parent=1 // pred_check_branch
      %323 = sbr.rel (0) target = $region41
    $region40: #{torch_estimator_forward.1} parent=1 // pred_region
      %324 = dma.done [#allocation4], 128
    $region41: #{torch_estimator_forward.1} parent=1 // pred_fallthru
      _
    %325 = vsyncpa [#allocation3], 1
    %326 = vsyncpa [#allocation4], 1

</llo_original>
